<compile_context>
chip_gen: v7x
topology: tpu7x:2x2x1
jax: 0.10.0
libtpu: 0.0.40
codegen_flags: <defaults>
</compile_context>

<pallas_src>
import functools

import jax
import jax.numpy as jnp
from jax.experimental import pallas as pl
from jax.experimental.pallas import tpu as pltpu

NEG_SLOPE = 0.01  # nn.LeakyReLU default negative_slope
LANE = 128


def _leaky_relu(x):
    return jnp.where(x > 0, x, NEG_SLOPE * x)


def _round_up(n, m):
    return (n + m - 1) // m * m


def mlp_kernel(x_ref, y_ref, w1x_ref, w1y_ref, b1_ref, w2_ref, b2_ref,
               w3_ref, b3_ref, o_ref, *, matmul_dtype):
    # One batch-tile of the fused 3-layer MLP; matmuls on the MXU, activations on the VPU.
    # cat([x, y], dim=1) @ W1 == x @ W1[:dx] + y @ W1[dx:]  -> concat folded into the kernel.
    x = x_ref[...].astype(matmul_dtype)
    y = y_ref[...].astype(matmul_dtype)
    h1 = (jnp.dot(x, w1x_ref[...], preferred_element_type=jnp.float32)
          + jnp.dot(y, w1y_ref[...], preferred_element_type=jnp.float32)
          + b1_ref[...])
    h1 = _leaky_relu(h1)                                   # f32 elementwise (v5e-safe)
    h2 = jnp.dot(h1.astype(matmul_dtype), w2_ref[...],
                 preferred_element_type=jnp.float32) + b2_ref[...]
    h2 = _leaky_relu(h2)
    h3 = jnp.dot(h2.astype(matmul_dtype), w3_ref[...],
                 preferred_element_type=jnp.float32) + b3_ref[...]
    o_ref[...] = jnp.maximum(h3, 0.0).astype(o_ref.dtype)  # final ReLU


def generator_forward(x, y, params, *, tb=None, matmul_dtype=jnp.float32):
    """Generator forward. x:[B,dx], y:[B,dy] -> [B, output_dim] (float32)."""
    w1, b1, w2, b2, w3, b3 = params
    B, dx = x.shape
    _, dy = y.shape
    din, dlat = w1.shape
    dout = w3.shape[1]
    assert din == dx + dy, "W1 fan-in must equal dx + dy"

    # ---- batch tiling: one big block for small B, 512-row tiles otherwise ----
    if tb is None:
        tb = _round_up(B, 8) if B <= 512 else 512
    assert tb % 8 == 0
    Bp = _round_up(B, tb)
    if Bp != B:
        x = jnp.pad(x, ((0, Bp - B), (0, 0)))
        y = jnp.pad(y, ((0, Bp - B), (0, 0)))

    # ---- lane-dense feature padding (exact: padded lanes stay zero through the net) ----
    dlat_p = _round_up(dlat, LANE)
    dout_p = _round_up(dout, LANE)
    w1x = jnp.pad(w1[:dx], ((0, 0), (0, dlat_p - dlat))).astype(matmul_dtype)
    w1y = jnp.pad(w1[dx:], ((0, 0), (0, dlat_p - dlat))).astype(matmul_dtype)
    b1p = jnp.pad(b1, ((0, 0), (0, dlat_p - dlat)))
    w2p = jnp.pad(w2, ((0, dlat_p - dlat), (0, dlat_p - dlat))).astype(matmul_dtype)
    b2p = jnp.pad(b2, ((0, 0), (0, dlat_p - dlat)))
    w3p = jnp.pad(w3, ((0, dlat_p - dlat), (0, dout_p - dout))).astype(matmul_dtype)
    b3p = jnp.pad(b3, ((0, 0), (0, dout_p - dout)))

    kernel = functools.partial(mlp_kernel, matmul_dtype=matmul_dtype)
    const = lambda i: (0, 0)  # weights/biases: same full block every grid step

    # TODO(synk): if latent_dim is ever scaled up (>=2048), add
    # pipeline_mode=pl.Buffered(1) on the weight BlockSpecs and raise
    # vmem_limit_bytes explicitly to stay within v7x's 64 MiB VMEM.
    out = pl.pallas_call(
        kernel,
        out_shape=jax.ShapeDtypeStruct((Bp, dout_p), jnp.float32),
        grid_spec=pltpu.PrefetchScalarGridSpec(
            num_scalar_prefetch=0,
            grid=(Bp // tb,),
            in_specs=[
                pl.BlockSpec((tb, dx), lambda i: (i, 0)),      # x batch tile
                pl.BlockSpec((tb, dy), lambda i: (i, 0)),      # y batch tile
                pl.BlockSpec((dx, dlat_p), const),             # W1x (full)
                pl.BlockSpec((dy, dlat_p), const),             # W1y (full)
                pl.BlockSpec((1, dlat_p), const),              # b1
                pl.BlockSpec((dlat_p, dlat_p), const),         # W2
                pl.BlockSpec((1, dlat_p), const),              # b2
                pl.BlockSpec((dlat_p, dout_p), const),         # W3
                pl.BlockSpec((1, dout_p), const),              # b3
            ],
            out_specs=pl.BlockSpec((tb, dout_p), lambda i: (i, 0)),
        ),
        compiler_params=pltpu.CompilerParams(
            dimension_semantics=("parallel",),
        ),
    )(x, y, w1x, w1y, b1p, w2p, b2p, w3p, b3p)

    return out[:B, :dout]


def init_generator_params(key, input_dim, latent_dim, output_dim):
    """Deterministic init mimicking nn.Linear's U(-1/sqrt(fan_in), 1/sqrt(fan_in))."""
    ks = jax.random.split(key, 6)

    def linear(kw, kb, fan_in, fan_out):
        bound = 1.0 / jnp.sqrt(float(fan_in))
        w = jax.random.uniform(kw, (fan_in, fan_out), jnp.float32, -bound, bound)
        b = jax.random.uniform(kb, (1, fan_out), jnp.float32, -bound, bound)
        return w, b

    w1, b1 = linear(ks[0], ks[1], input_dim, latent_dim)
    w2, b2 = linear(ks[2], ks[3], latent_dim, latent_dim)
    w3, b3 = linear(ks[4], ks[5], latent_dim, output_dim)
    return (w1, b1, w2, b2, w3, b3)


def _reference_forward(x, y, params):
    w1, b1, w2, b2, w3, b3 = params
    h = jnp.concatenate([x, y], axis=1)
    h = _leaky_relu(h @ w1 + b1)
    h = _leaky_relu(h @ w2 + b2)
    return jnp.maximum(h @ w3 + b3, 0.0)


if __name__ == "__main__":
    # Small shapes consistent with the module: input_dim = dx + dy.
    batch, dx, dy = 8, 16, 16
    input_dim, latent_dim, output_dim = dx + dy, 64, 32

    key = jax.random.PRNGKey(0)
    kx, ky, kp = jax.random.split(key, 3)
    x = jax.random.normal(kx, (batch, dx), jnp.float32)
    y = jax.random.normal(ky, (batch, dy), jnp.float32)
    params = init_generator_params(kp, input_dim, latent_dim, output_dim)

    ref = _reference_forward(x, y, params)

    # f32 path (matches the PyTorch/JAX reference to fp32 rounding).
    out = jax.block_until_ready(generator_forward(x, y, params))
    assert out.shape == (batch, output_dim)
    assert jnp.allclose(out, ref, atol=1e-5, rtol=1e-5)

    # bf16-MXU path (v6e/v7x fast path): bf16 operands, f32 accumulation.
    out_bf16 = jax.block_until_ready(
        generator_forward(x, y, params, matmul_dtype=jnp.bfloat16))
    assert out_bf16.shape == (batch, output_dim)
    assert jnp.allclose(out_bf16, ref, atol=1.5e-1, rtol=1.5e-1)

    # Larger, non-multiple-of-8 batch exercising the multi-step tiled grid path.
    big_batch = 1000
    kxb, kyb = jax.random.split(jax.random.PRNGKey(1), 2)
    xb = jax.random.normal(kxb, (big_batch, dx), jnp.float32)
    yb = jax.random.normal(kyb, (big_batch, dy), jnp.float32)
    out_big = jax.block_until_ready(generator_forward(xb, yb, params, tb=256))
    ref_big = _reference_forward(xb, yb, params)
    assert out_big.shape == (big_batch, output_dim)
    assert jnp.allclose(out_big, ref_big, atol=1e-4, rtol=1e-4)

    print("KERNEL_OK")
</pallas_src>

<mosaic_0001>
module attributes {stable_mosaic.version = 11 : i64} {
  func.func @mlp_kernel(%arg0: i32, %arg1: memref<8x16xf32, #tpu.memory_space<vmem>>, %arg2: memref<8x16xf32, #tpu.memory_space<vmem>>, %arg3: memref<16x128xf32, #tpu.memory_space<vmem>>, %arg4: memref<16x128xf32, #tpu.memory_space<vmem>>, %arg5: memref<1x128xf32, #tpu.memory_space<vmem>>, %arg6: memref<128x128xf32, #tpu.memory_space<vmem>>, %arg7: memref<1x128xf32, #tpu.memory_space<vmem>>, %arg8: memref<128x128xf32, #tpu.memory_space<vmem>>, %arg9: memref<1x128xf32, #tpu.memory_space<vmem>>, %arg10: memref<8x128xf32, #tpu.memory_space<vmem>>) attributes {dimension_semantics = [#tpu.dimension_semantics<parallel>], iteration_bounds = array<i64: 1>, scalar_prefetch = 0 : i64, scratch_operands = 0 : i64, tpu.core_type = #tpu.core_type<tc>, window_params = [{transform_indices = @transform_0, window_bounds = array<i64: 8, 16>}, {transform_indices = @transform_1, window_bounds = array<i64: 8, 16>}, {pipeline_mode = #tpu.pipeline_mode<synchronous>, transform_indices = @transform_2, window_bounds = array<i64: 16, 128>}, {pipeline_mode = #tpu.pipeline_mode<synchronous>, transform_indices = @transform_3, window_bounds = array<i64: 16, 128>}, {pipeline_mode = #tpu.pipeline_mode<synchronous>, transform_indices = @transform_4, window_bounds = array<i64: 1, 128>}, {pipeline_mode = #tpu.pipeline_mode<synchronous>, transform_indices = @transform_5, window_bounds = array<i64: 128, 128>}, {pipeline_mode = #tpu.pipeline_mode<synchronous>, transform_indices = @transform_6, window_bounds = array<i64: 1, 128>}, {pipeline_mode = #tpu.pipeline_mode<synchronous>, transform_indices = @transform_7, window_bounds = array<i64: 128, 128>}, {pipeline_mode = #tpu.pipeline_mode<synchronous>, transform_indices = @transform_8, window_bounds = array<i64: 1, 128>}, {transform_indices = @transform_9, window_bounds = array<i64: 8, 128>}]} {
    %c0 = arith.constant 0 : index
    %c0_0 = arith.constant 0 : index
    %0 = vector.load %arg1[%c0, %c0_0] : memref<8x16xf32, #tpu.memory_space<vmem>>, vector<8x16xf32>
    %c0_1 = arith.constant 0 : index
    %c0_2 = arith.constant 0 : index
    %1 = vector.load %arg2[%c0_1, %c0_2] : memref<8x16xf32, #tpu.memory_space<vmem>>, vector<8x16xf32>
    %c0_3 = arith.constant 0 : index
    %c0_4 = arith.constant 0 : index
    %2 = vector.load %arg3[%c0_3, %c0_4] : memref<16x128xf32, #tpu.memory_space<vmem>>, vector<16x128xf32>
    %cst = arith.constant dense<0.000000e+00> : vector<8x128xf32>
    %3 = tpu.matmul %0, %2, %cst {dimension_numbers = #tpu.dot_dimension_numbers<[1], [0], [0], [1], [0, 0, 1, 1], [], []>} : vector<8x16xf32>, vector<16x128xf32>, vector<8x128xf32> -> vector<8x128xf32>
    %c0_5 = arith.constant 0 : index
    %c0_6 = arith.constant 0 : index
    %4 = vector.load %arg4[%c0_5, %c0_6] : memref<16x128xf32, #tpu.memory_space<vmem>>, vector<16x128xf32>
    %cst_7 = arith.constant dense<0.000000e+00> : vector<8x128xf32>
    %5 = tpu.matmul %1, %4, %cst_7 {dimension_numbers = #tpu.dot_dimension_numbers<[1], [0], [0], [1], [0, 0, 1, 1], [], []>} : vector<8x16xf32>, vector<16x128xf32>, vector<8x128xf32> -> vector<8x128xf32>
    %6 = arith.addf %3, %5 : vector<8x128xf32>
    %c0_8 = arith.constant 0 : index
    %c0_9 = arith.constant 0 : index
    %7 = vector.load %arg5[%c0_8, %c0_9] : memref<1x128xf32, #tpu.memory_space<vmem>>, vector<1x128xf32>
    %8 = vector.broadcast %7 : vector<1x128xf32> to vector<8x128xf32>
    %9 = arith.addf %6, %8 : vector<8x128xf32>
    %cst_10 = arith.constant 0.000000e+00 : f32
    %10 = vector.broadcast %cst_10 : f32 to vector<8x128xf32>
    %11 = arith.cmpf ogt, %9, %10 : vector<8x128xf32>
    %cst_11 = arith.constant 0.00999999977 : f32
    %12 = vector.broadcast %cst_11 : f32 to vector<8x128xf32>
    %13 = arith.mulf %12, %9 : vector<8x128xf32>
    %14 = arith.select %11, %9, %13 : vector<8x128xi1>, vector<8x128xf32>
    %c0_12 = arith.constant 0 : index
    %c0_13 = arith.constant 0 : index
    %15 = vector.load %arg6[%c0_12, %c0_13] : memref<128x128xf32, #tpu.memory_space<vmem>>, vector<128x128xf32>
    %cst_14 = arith.constant dense<0.000000e+00> : vector<8x128xf32>
    %16 = tpu.matmul %14, %15, %cst_14 {dimension_numbers = #tpu.dot_dimension_numbers<[1], [0], [0], [1], [0, 0, 1, 1], [], []>} : vector<8x128xf32>, vector<128x128xf32>, vector<8x128xf32> -> vector<8x128xf32>
    %c0_15 = arith.constant 0 : index
    %c0_16 = arith.constant 0 : index
    %17 = vector.load %arg7[%c0_15, %c0_16] : memref<1x128xf32, #tpu.memory_space<vmem>>, vector<1x128xf32>
    %18 = vector.broadcast %17 : vector<1x128xf32> to vector<8x128xf32>
    %19 = arith.addf %16, %18 : vector<8x128xf32>
    %cst_17 = arith.constant 0.000000e+00 : f32
    %20 = vector.broadcast %cst_17 : f32 to vector<8x128xf32>
    %21 = arith.cmpf ogt, %19, %20 : vector<8x128xf32>
    %cst_18 = arith.constant 0.00999999977 : f32
    %22 = vector.broadcast %cst_18 : f32 to vector<8x128xf32>
    %23 = arith.mulf %22, %19 : vector<8x128xf32>
    %24 = arith.select %21, %19, %23 : vector<8x128xi1>, vector<8x128xf32>
    %c0_19 = arith.constant 0 : index
    %c0_20 = arith.constant 0 : index
    %25 = vector.load %arg8[%c0_19, %c0_20] : memref<128x128xf32, #tpu.memory_space<vmem>>, vector<128x128xf32>
    %cst_21 = arith.constant dense<0.000000e+00> : vector<8x128xf32>
    %26 = tpu.matmul %24, %25, %cst_21 {dimension_numbers = #tpu.dot_dimension_numbers<[1], [0], [0], [1], [0, 0, 1, 1], [], []>} : vector<8x128xf32>, vector<128x128xf32>, vector<8x128xf32> -> vector<8x128xf32>
    %c0_22 = arith.constant 0 : index
    %c0_23 = arith.constant 0 : index
    %27 = vector.load %arg9[%c0_22, %c0_23] : memref<1x128xf32, #tpu.memory_space<vmem>>, vector<1x128xf32>
    %28 = vector.broadcast %27 : vector<1x128xf32> to vector<8x128xf32>
    %29 = arith.addf %26, %28 : vector<8x128xf32>
    %cst_24 = arith.constant 0.000000e+00 : f32
    %30 = vector.broadcast %cst_24 : f32 to vector<8x128xf32>
    %31 = arith.maximumf %29, %30 : vector<8x128xf32>
    %c0_25 = arith.constant 0 : index
    %c0_26 = arith.constant 0 : index
    %32 = vector.load %arg10[%c0_25, %c0_26] : memref<8x128xf32, #tpu.memory_space<vmem>>, vector<8x128xf32>
    tpu.vector_store %arg10[%c0_25, %c0_26], %31 {strides = array<i32>} : memref<8x128xf32, #tpu.memory_space<vmem>>, vector<8x128xf32>,
    return
  }
  func.func @transform_0(%arg0: i32) -> (i32, i32) {
    %c0_i32 = arith.constant 0 : i32
    %c0_i32_0 = arith.constant 0 : i32
    return %arg0, %c0_i32 : i32, i32
  }
  func.func @transform_1(%arg0: i32) -> (i32, i32) {
    %c0_i32 = arith.constant 0 : i32
    %c0_i32_0 = arith.constant 0 : i32
    return %arg0, %c0_i32 : i32, i32
  }
  func.func @transform_2(%arg0: i32) -> (i32, i32) {
    %c0_i32 = arith.constant 0 : i32
    %c0_i32_0 = arith.constant 0 : i32
    %c0_i32_1 = arith.constant 0 : i32
    return %c0_i32, %c0_i32_0 : i32, i32
  }
  func.func @transform_3(%arg0: i32) -> (i32, i32) {
    %c0_i32 = arith.constant 0 : i32
    %c0_i32_0 = arith.constant 0 : i32
    %c0_i32_1 = arith.constant 0 : i32
    return %c0_i32, %c0_i32_0 : i32, i32
  }
  func.func @transform_4(%arg0: i32) -> (i32, i32) {
    %c0_i32 = arith.constant 0 : i32
    %c0_i32_0 = arith.constant 0 : i32
    %c0_i32_1 = arith.constant 0 : i32
    return %c0_i32, %c0_i32_0 : i32, i32
  }
  func.func @transform_5(%arg0: i32) -> (i32, i32) {
    %c0_i32 = arith.constant 0 : i32
    %c0_i32_0 = arith.constant 0 : i32
    %c0_i32_1 = arith.constant 0 : i32
    return %c0_i32, %c0_i32_0 : i32, i32
  }
  func.func @transform_6(%arg0: i32) -> (i32, i32) {
    %c0_i32 = arith.constant 0 : i32
    %c0_i32_0 = arith.constant 0 : i32
    %c0_i32_1 = arith.constant 0 : i32
    return %c0_i32, %c0_i32_0 : i32, i32
  }
  func.func @transform_7(%arg0: i32) -> (i32, i32) {
    %c0_i32 = arith.constant 0 : i32
    %c0_i32_0 = arith.constant 0 : i32
    %c0_i32_1 = arith.constant 0 : i32
    return %c0_i32, %c0_i32_0 : i32, i32
  }
  func.func @transform_8(%arg0: i32) -> (i32, i32) {
    %c0_i32 = arith.constant 0 : i32
    %c0_i32_0 = arith.constant 0 : i32
    %c0_i32_1 = arith.constant 0 : i32
    return %c0_i32, %c0_i32_0 : i32, i32
  }
  func.func @transform_9(%arg0: i32) -> (i32, i32) {
    %c0_i32 = arith.constant 0 : i32
    %c0_i32_0 = arith.constant 0 : i32
    return %arg0, %c0_i32 : i32, i32
  }
}

</mosaic_0001>

<llo_original>
// kernel: tpu_custom_call.1
$region0: #{tpu_custom_call.1}
  #allocation0 [shape = 'u32[]', space=smem, size = 0x4, offset = 0x4, fixed_abs, tag = 'smem constant byte address 0x4 - core index']
  #allocation1 [shape = 'u32[144,128]{1,0:T(1,128)}', space=vmem, size = 0x12000, scoped, tag = 'internal scratch']
  %s0 = inlined_call_operand.hbm [shape: f32[8,16], index: 0, kind: input, shape index: {}]
  %s1 = inlined_call_operand.hbm [shape: f32[8,16], index: 1, kind: input, shape index: {}]
  %s2 = inlined_call_operand.hbm [shape: f32[16,128], index: 2, kind: input, shape index: {}]
  %s3 = inlined_call_operand.hbm [shape: f32[16,128], index: 3, kind: input, shape index: {}]
  %s4 = inlined_call_operand.vmem [shape: f32[1,128], index: 4, kind: input, shape index: {}]
  %s5 = inlined_call_operand.hbm [shape: f32[128,128], index: 5, kind: input, shape index: {}]
  %s6 = inlined_call_operand.vmem [shape: f32[1,128], index: 6, kind: input, shape index: {}]
  %s7 = inlined_call_operand.hbm [shape: f32[128,128], index: 7, kind: input, shape index: {}]
  %s8 = inlined_call_operand.vmem [shape: f32[1,128], index: 8, kind: input, shape index: {}]
  %s9 = inlined_call_operand.hbm [shape: f32[8,128], index: 9, kind: output, shape index: {}]
  %s10 = sld [smem:[#allocation0]]
  $region70: #{tpu_custom_call.1} parent=0
    _
  %s12 = ssub.s32 1, %s10
  %s13 = scalar_select 0, %s12, %s10
  $region1: #{tpu_custom_call.1} parent=0
    #allocation2 [shape = 'u8[4096]{0}', space=vmem, size = 0x1000, scoped, tag = 'input window, operand 0, single buffered']
    #allocation3 [shape = 's32[1]{0}', space=sflag, size = 0x4, scoped, tag = 'scoped memory for tpu_custom_call.1']
    #allocation4 [shape = 's32[1]{0}', space=sflag, size = 0x4, scoped, tag = 'scoped memory for tpu_custom_call.1']
    #allocation5 [shape = 'u8[4096]{0}', space=vmem, size = 0x1000, scoped, tag = 'input window, operand 1, single buffered']
    #allocation6 [shape = 's32[1]{0}', space=sflag, size = 0x4, scoped, tag = 'scoped memory for tpu_custom_call.1']
    #allocation7 [shape = 'u8[8192]{0}', space=vmem, size = 0x2000, scoped, tag = 'input window, operand 2, single buffered']
    #allocation8 [shape = 'u8[8192]{0}', space=vmem, size = 0x2000, scoped, tag = 'input window, operand 3, single buffered']
    #allocation9 [shape = 's32[1]{0}', space=sflag, size = 0x4, scoped, tag = 'scoped memory for tpu_custom_call.1']
    #allocation10 [shape = 'u8[65536]{0}', space=vmem, size = 0x10000, scoped, tag = 'input window, operand 5, single buffered']
    #allocation11 [shape = 'u8[65536]{0}', space=vmem, size = 0x10000, scoped, tag = 'input window, operand 7, single buffered']
    #allocation12 [shape = 's32[1]{0}', space=sflag, size = 0x4, scoped, tag = 'scoped memory for tpu_custom_call.1']
    #allocation13 [shape = 'u8[4096]{0}', space=vmem, size = 0x1000, scoped, tag = 'output window, operand 0, single buffered']
    %14 = vsyncpa [#allocation3], 0
    %15 = vsyncpa [#allocation6], 0
    %16 = vsyncpa [#allocation9], 0
    %17 = vsyncpa [#allocation12], 0
    %18 = vsyncpa [#allocation4], 0
    // Predicated region
    $region2: #{tpu_custom_call.1} parent=1 // pred_check
      _
    $region3: #{tpu_custom_call.1} parent=1 // pred_check_branch
      %20 = sbr.rel (0) target = $region5
    $region4: #{tpu_custom_call.1} parent=1 // pred_region
      %s22 = ssub.s32 128, 128
      %23 = vsyncadd [#allocation3], %s22
      %s25 = sshll.u32 [#allocation2], 4
      %s26 = int_to_ptr.vmem [resolvable:$true] %s25
      %28 = dma.hbm_to_vmem [thread:$0]  %s0, 128, %s26, [#allocation3]
    $region5: #{tpu_custom_call.1} parent=1 // pred_fallthru
      _
    // Predicated region
    $region6: #{tpu_custom_call.1} parent=1 // pred_check
      _
    $region7: #{tpu_custom_call.1} parent=1 // pred_check_branch
      %30 = sbr.rel (0) target = $region9
    $region8: #{tpu_custom_call.1} parent=1 // pred_region
      %s32 = ssub.s32 128, 128
      %33 = vsyncadd [#allocation6], %s32
      %s35 = sshll.u32 [#allocation5], 4
      %s36 = int_to_ptr.vmem [resolvable:$true] %s35
      %38 = dma.hbm_to_vmem [thread:$0]  %s1, 128, %s36, [#allocation6]
    $region9: #{tpu_custom_call.1} parent=1 // pred_fallthru
      _
    // Predicated region
    $region10: #{tpu_custom_call.1} parent=1 // pred_check
      _
    $region11: #{tpu_custom_call.1} parent=1 // pred_check_branch
      %40 = sbr.rel (0) target = $region13
    $region12: #{tpu_custom_call.1} parent=1 // pred_region
      %s42 = ssub.s32 256, 256
      %43 = vsyncadd [#allocation6], %s42
      %s44 = sshll.u32 [#allocation7], 4
      %s45 = int_to_ptr.vmem [resolvable:$true] %s44
      %50 = dma.hbm_to_vmem [thread:$0]  %s2, 256, %s45, [#allocation6], 128, 128, 8
    $region13: #{tpu_custom_call.1} parent=1 // pred_fallthru
      _
    // Predicated region
    $region14: #{tpu_custom_call.1} parent=1 // pred_check
      _
    $region15: #{tpu_custom_call.1} parent=1 // pred_check_branch
      %52 = sbr.rel (0) target = $region17
    $region16: #{tpu_custom_call.1} parent=1 // pred_region
      %s54 = ssub.s32 256, 256
      %55 = vsyncadd [#allocation9], %s54
      %s56 = sshll.u32 [#allocation8], 4
      %s57 = int_to_ptr.vmem [resolvable:$true] %s56
      %62 = dma.hbm_to_vmem [thread:$0]  %s3, 256, %s57, [#allocation9], 128, 128, 8
    $region17: #{tpu_custom_call.1} parent=1 // pred_fallthru
      _
    // Predicated region
    $region18: #{tpu_custom_call.1} parent=1 // pred_check
      _
    $region19: #{tpu_custom_call.1} parent=1 // pred_check_branch
      %64 = sbr.rel (0) target = $region21
    $region20: #{tpu_custom_call.1} parent=1 // pred_region
      _
    $region21: #{tpu_custom_call.1} parent=1 // pred_fallthru
      _
    // Predicated region
    $region22: #{tpu_custom_call.1} parent=1 // pred_check
      _
    $region23: #{tpu_custom_call.1} parent=1 // pred_check_branch
      %66 = sbr.rel (0) target = $region25
    $region24: #{tpu_custom_call.1} parent=1 // pred_region
      %s68 = ssub.s32 2048, 2048
      %69 = vsyncadd [#allocation9], %s68
      %s70 = sshll.u32 [#allocation10], 4
      %s71 = int_to_ptr.vmem [resolvable:$true] %s70
      %76 = dma.hbm_to_vmem [thread:$0]  %s5, 2048, %s71, [#allocation9], 128, 128, 8
    $region25: #{tpu_custom_call.1} parent=1 // pred_fallthru
      _
    // Predicated region
    $region26: #{tpu_custom_call.1} parent=1 // pred_check
      _
    $region27: #{tpu_custom_call.1} parent=1 // pred_check_branch
      %78 = sbr.rel (0) target = $region29
    $region28: #{tpu_custom_call.1} parent=1 // pred_region
      _
    $region29: #{tpu_custom_call.1} parent=1 // pred_fallthru
      _
    // Predicated region
    $region30: #{tpu_custom_call.1} parent=1 // pred_check
      _
    $region31: #{tpu_custom_call.1} parent=1 // pred_check_branch
      %80 = sbr.rel (0) target = $region33
    $region32: #{tpu_custom_call.1} parent=1 // pred_region
      %s82 = ssub.s32 2048, 2048
      %83 = vsyncadd [#allocation12], %s82
      %s84 = sshll.u32 [#allocation11], 4
      %s85 = int_to_ptr.vmem [resolvable:$true] %s84
      %90 = dma.hbm_to_vmem [thread:$0]  %s7, 2048, %s85, [#allocation12], 128, 128, 8
    $region33: #{tpu_custom_call.1} parent=1 // pred_fallthru
      _
    // Predicated region
    $region34: #{tpu_custom_call.1} parent=1 // pred_check
      _
    $region35: #{tpu_custom_call.1} parent=1 // pred_check_branch
      %92 = sbr.rel (0) target = $region37
    $region36: #{tpu_custom_call.1} parent=1 // pred_region
      _
    $region37: #{tpu_custom_call.1} parent=1 // pred_fallthru
      _
    // Predicated region
    $region38: #{tpu_custom_call.1} parent=1 // pred_check
      _
    $region39: #{tpu_custom_call.1} parent=1 // pred_check_branch
      %94 = sbr.rel (0) target = $region41
    $region40: #{tpu_custom_call.1} parent=1 // pred_region
      %95 = dma.done [#allocation3], 128
    $region41: #{tpu_custom_call.1} parent=1 // pred_fallthru
      _
    // Predicated region
    $region42: #{tpu_custom_call.1} parent=1 // pred_check
      _
    $region43: #{tpu_custom_call.1} parent=1 // pred_check_branch
      %97 = sbr.rel (0) target = $region45
    $region44: #{tpu_custom_call.1} parent=1 // pred_region
      %98 = dma.done [#allocation6], 128
    $region45: #{tpu_custom_call.1} parent=1 // pred_fallthru
      _
    // Predicated region
    $region46: #{tpu_custom_call.1} parent=1 // pred_check
      _
    $region47: #{tpu_custom_call.1} parent=1 // pred_check_branch
      %100 = sbr.rel (0) target = $region49
    $region48: #{tpu_custom_call.1} parent=1 // pred_region
      %101 = dma.done [#allocation6], 256
    $region49: #{tpu_custom_call.1} parent=1 // pred_fallthru
      _
    // Predicated region
    $region50: #{tpu_custom_call.1} parent=1 // pred_check
      _
    $region51: #{tpu_custom_call.1} parent=1 // pred_check_branch
      %103 = sbr.rel (0) target = $region53
    $region52: #{tpu_custom_call.1} parent=1 // pred_region
      %104 = dma.done [#allocation9], 256
    $region53: #{tpu_custom_call.1} parent=1 // pred_fallthru
      _
    // Predicated region
    $region54: #{tpu_custom_call.1} parent=1 // pred_check
      _
    $region55: #{tpu_custom_call.1} parent=1 // pred_check_branch
      %106 = sbr.rel (0) target = $region57
    $region56: #{tpu_custom_call.1} parent=1 // pred_region
      %107 = dma.done [#allocation9], 2048
    $region57: #{tpu_custom_call.1} parent=1 // pred_fallthru
      _
    // Predicated region
    $region58: #{tpu_custom_call.1} parent=1 // pred_check
      _
    $region59: #{tpu_custom_call.1} parent=1 // pred_check_branch
      %109 = sbr.rel (0) target = $region61
    $region60: #{tpu_custom_call.1} parent=1 // pred_region
      %110 = dma.done [#allocation12], 2048
    $region61: #{tpu_custom_call.1} parent=1 // pred_fallthru
      _
    %v111 = vld [vmem:[#allocation2] sm:$0xff]
    %v112 = vld [vmem:[#allocation5] sm:$0xff]
    %v113 = vld [vmem:[#allocation7] sm:$0xff]
    %v114 = vld [vmem:[#allocation7 + $0x8] sm:$0xff]
    %v115 = vld [vmem:[#allocation8] sm:$0xff]
    %v116 = vld [vmem:[#allocation8 + $0x8] sm:$0xff]
    %vm117 = vcmask 130048
    %v119 = vsel %vm117, %v112, 0
    %121 = vmatprep.subr.mxu0 0.0
    %122 = vmatpush1.msra.mxu0 %v115
    %123 = vmatprep.subr.mxu0 0.0
    %124 = vmatpush1.msra.mxu0 %v116
    %125 = vmatprep.subr.mxu0 0.0
    %126 = vmatpush1.msra.mxu0 0.0
    %127 = vmatprep.subr.mxu0 0.0
    %128 = vmatpush1.msra.mxu0 0.0
    %129 = vmatprep.subr.mxu0 0.0
    %130 = vmatpush1.msra.mxu0 0.0
    %131 = vmatprep.subr.mxu0 0.0
    %132 = vmatpush1.msra.mxu0 0.0
    %133 = vmatprep.subr.mxu0 0.0
    %134 = vmatpush1.msra.mxu0 0.0
    %135 = vmatprep.subr.mxu0 0.0
    %136 = vmatpush1.msra.mxu0 0.0
    %137 = vmatprep.subr.mxu0 0.0
    %138 = vmatpush1.msra.mxu0 0.0
    %139 = vmatprep.subr.mxu0 0.0
    %140 = vmatpush1.msra.mxu0 0.0
    %141 = vmatprep.subr.mxu0 0.0
    %142 = vmatpush1.msra.mxu0 0.0
    %143 = vmatprep.subr.mxu0 0.0
    %144 = vmatpush1.msra.mxu0 0.0
    %145 = vmatprep.subr.mxu0 0.0
    %146 = vmatpush1.msra.mxu0 0.0
    %147 = vmatprep.subr.mxu0 0.0
    %148 = vmatpush1.msra.mxu0 0.0
    %149 = vmatprep.subr.mxu0 0.0
    %150 = vmatpush1.msra.mxu0 0.0
    %151 = vmatprep.subr.mxu0 0.0
    %152 = vmatpush1.msra.mxu0 0.0
    %153 = vmatprep.subr.mxu0 0.0
    %154 = vmatpush1.msra.mxu0 0.0
    %155 = vmatprep.subr.mxu0 0.0
    %156 = vmatpush1.msra.mxu0 0.0
    %157 = vmatprep.subr.mxu0 0.0
    %158 = vmatpush1.msra.mxu0 0.0
    %159 = vmatprep.subr.mxu0 0.0
    %160 = vmatpush1.msra.mxu0 0.0
    %161 = vmatprep.subr.mxu0 0.0
    %162 = vmatpush1.msra.mxu0 0.0
    %163 = vmatprep.subr.mxu0 0.0
    %164 = vmatpush1.msra.mxu0 0.0
    %165 = vmatprep.subr.mxu0 0.0
    %166 = vmatpush1.msra.mxu0 0.0
    %167 = vmatprep.subr.mxu0 0.0
    %168 = vmatpush1.msra.mxu0 0.0
    %169 = vmatprep.subr.mxu0 0.0
    %170 = vmatpush1.msra.mxu0 0.0
    %171 = vmatprep.subr.mxu0 0.0
    %172 = vmatpush1.msra.mxu0 0.0
    %173 = vmatprep.subr.mxu0 0.0
    %174 = vmatpush1.msra.mxu0 0.0
    %175 = vmatprep.subr.mxu0 0.0
    %176 = vmatpush1.msra.mxu0 0.0
    %177 = vmatprep.subr.mxu0 0.0
    %178 = vmatpush1.msra.mxu0 0.0
    %179 = vmatprep.subr.mxu0 0.0
    %180 = vmatpush1.msra.mxu0 0.0
    %181 = vmatprep.subr.mxu0 0.0
    %182 = vmatpush1.msra.mxu0 0.0
    %183 = vmatprep.subr.mxu0 0.0
    %184 = vmatpush1.msra.mxu0 0.0
    %185 = vmatprep.mubr.f32.mxu0 0.0
    %186 = vmatmul.mubr.f32.gmra.mrb[0].mxu0 %v119
    %v187 = vpop.f32.mrb[0].mxu0
    %v188 = vadd.f32 0.0, %v187
    %v189 = vpop.f32.mrb[0].mxu0
    %190 = vdwg.mxu0
    %v192 = vsel %vm117, %v111, 0
    %194 = vmatprep.subr.mxu0 0.0
    %195 = vmatpush1.msra.mxu0 %v113
    %196 = vmatprep.subr.mxu0 0.0
    %197 = vmatpush1.msra.mxu0 %v114
    %198 = vmatprep.subr.mxu0 0.0
    %199 = vmatpush1.msra.mxu0 0.0
    %200 = vmatprep.subr.mxu0 0.0
    %201 = vmatpush1.msra.mxu0 0.0
    %202 = vmatprep.subr.mxu0 0.0
    %203 = vmatpush1.msra.mxu0 0.0
    %204 = vmatprep.subr.mxu0 0.0
    %205 = vmatpush1.msra.mxu0 0.0
    %206 = vmatprep.subr.mxu0 0.0
    %207 = vmatpush1.msra.mxu0 0.0
    %208 = vmatprep.subr.mxu0 0.0
    %209 = vmatpush1.msra.mxu0 0.0
    %210 = vmatprep.subr.mxu0 0.0
    %211 = vmatpush1.msra.mxu0 0.0
    %212 = vmatprep.subr.mxu0 0.0
    %213 = vmatpush1.msra.mxu0 0.0
    %214 = vmatprep.subr.mxu0 0.0
    %215 = vmatpush1.msra.mxu0 0.0
    %216 = vmatprep.subr.mxu0 0.0
    %217 = vmatpush1.msra.mxu0 0.0
    %218 = vmatprep.subr.mxu0 0.0
    %219 = vmatpush1.msra.mxu0 0.0
    %220 = vmatprep.subr.mxu0 0.0
    %221 = vmatpush1.msra.mxu0 0.0
    %222 = vmatprep.subr.mxu0 0.0
    %223 = vmatpush1.msra.mxu0 0.0
    %224 = vmatprep.subr.mxu0 0.0
    %225 = vmatpush1.msra.mxu0 0.0
    %226 = vmatprep.subr.mxu0 0.0
    %227 = vmatpush1.msra.mxu0 0.0
    %228 = vmatprep.subr.mxu0 0.0
    %229 = vmatpush1.msra.mxu0 0.0
    %230 = vmatprep.subr.mxu0 0.0
    %231 = vmatpush1.msra.mxu0 0.0
    %232 = vmatprep.subr.mxu0 0.0
    %233 = vmatpush1.msra.mxu0 0.0
    %234 = vmatprep.subr.mxu0 0.0
    %235 = vmatpush1.msra.mxu0 0.0
    %236 = vmatprep.subr.mxu0 0.0
    %237 = vmatpush1.msra.mxu0 0.0
    %238 = vmatprep.subr.mxu0 0.0
    %239 = vmatpush1.msra.mxu0 0.0
    %240 = vmatprep.subr.mxu0 0.0
    %241 = vmatpush1.msra.mxu0 0.0
    %242 = vmatprep.subr.mxu0 0.0
    %243 = vmatpush1.msra.mxu0 0.0
    %244 = vmatprep.subr.mxu0 0.0
    %245 = vmatpush1.msra.mxu0 0.0
    %246 = vmatprep.subr.mxu0 0.0
    %247 = vmatpush1.msra.mxu0 0.0
    %248 = vmatprep.subr.mxu0 0.0
    %249 = vmatpush1.msra.mxu0 0.0
    %250 = vmatprep.subr.mxu0 0.0
    %251 = vmatpush1.msra.mxu0 0.0
    %252 = vmatprep.subr.mxu0 0.0
    %253 = vmatpush1.msra.mxu0 0.0
    %254 = vmatprep.subr.mxu0 0.0
    %255 = vmatpush1.msra.mxu0 0.0
    %256 = vmatprep.subr.mxu0 0.0
    %257 = vmatpush1.msra.mxu0 0.0
    %258 = vmatprep.mubr.f32.mxu0 0.0
    %259 = vmatmul.mubr.f32.gmra.mrb[0].mxu0 %v192
    %v260 = vpop.f32.mrb[0].mxu0
    %v261 = vadd.f32 %v188, %v260
    %v262 = vpop.f32.mrb[0].mxu0
    %263 = vdwg.mxu0
    %v264 = vld [vmem:[%s4] sm:$0x1]
    %v266 = vlaneseq
    %v267 = vshrl.u32 %v266, 7
    %v268 = vsub.s32 0, %v267
    %v269 = vrot.slane %v264, %v268
    %v271 = vadd.f32 %v261, %v269
    %vm272 = vcmp.gt.f32.partialorder %v271, 0.0
    %v273 = vmul.f32 %v271, 0.01
    %v274 = vsel %vm272, %v271, %v273
    %v275 = vld [vmem:[#allocation10] sm:$0xff]
    %v276 = vld [vmem:[#allocation10 + $0x8] sm:$0xff]
    %v277 = vld [vmem:[#allocation10 + $0x10] sm:$0xff]
    %v278 = vld [vmem:[#allocation10 + $0x18] sm:$0xff]
    %v279 = vld [vmem:[#allocation10 + $0x20] sm:$0xff]
    %v280 = vld [vmem:[#allocation10 + $0x28] sm:$0xff]
    %v281 = vld [vmem:[#allocation10 + $0x30] sm:$0xff]
    %v282 = vld [vmem:[#allocation10 + $0x38] sm:$0xff]
    %v283 = vld [vmem:[#allocation10 + $0x40] sm:$0xff]
    %v284 = vld [vmem:[#allocation10 + $0x48] sm:$0xff]
    %v285 = vld [vmem:[#allocation10 + $0x50] sm:$0xff]
    %v286 = vld [vmem:[#allocation10 + $0x58] sm:$0xff]
    %v287 = vld [vmem:[#allocation10 + $0x60] sm:$0xff]
    %v288 = vld [vmem:[#allocation10 + $0x68] sm:$0xff]
    %v289 = vld [vmem:[#allocation10 + $0x70] sm:$0xff]
    %v290 = vld [vmem:[#allocation10 + $0x78] sm:$0xff]
    %v291 = vld [vmem:[%s6] sm:$0x1]
    %v293 = vlaneseq
    %v294 = vshrl.u32 %v293, 7
    %v295 = vsub.s32 0, %v294
    %v296 = vrot.slane %v291, %v295
    %298 = vmatprep.subr.mxu0 0.0
    %299 = vmatpush1.msra.mxu0 %v275
    %300 = vmatprep.subr.mxu0 0.0
    %301 = vmatpush1.msra.mxu0 %v276
    %302 = vmatprep.subr.mxu0 0.0
    %303 = vmatpush1.msra.mxu0 %v277
    %304 = vmatprep.subr.mxu0 0.0
    %305 = vmatpush1.msra.mxu0 %v278
    %306 = vmatprep.subr.mxu0 0.0
    %307 = vmatpush1.msra.mxu0 %v279
    %308 = vmatprep.subr.mxu0 0.0
    %309 = vmatpush1.msra.mxu0 %v280
    %310 = vmatprep.subr.mxu0 0.0
    %311 = vmatpush1.msra.mxu0 %v281
    %312 = vmatprep.subr.mxu0 0.0
    %313 = vmatpush1.msra.mxu0 %v282
    %314 = vmatprep.subr.mxu0 0.0
    %315 = vmatpush1.msra.mxu0 %v283
    %316 = vmatprep.subr.mxu0 0.0
    %317 = vmatpush1.msra.mxu0 %v284
    %318 = vmatprep.subr.mxu0 0.0
    %319 = vmatpush1.msra.mxu0 %v285
    %320 = vmatprep.subr.mxu0 0.0
    %321 = vmatpush1.msra.mxu0 %v286
    %322 = vmatprep.subr.mxu0 0.0
    %323 = vmatpush1.msra.mxu0 %v287
    %324 = vmatprep.subr.mxu0 0.0
    %325 = vmatpush1.msra.mxu0 %v288
    %326 = vmatprep.subr.mxu0 0.0
    %327 = vmatpush1.msra.mxu0 %v289
    %328 = vmatprep.subr.mxu0 0.0
    %329 = vmatpush1.msra.mxu0 %v290
    %330 = vmatprep.subr.mxu0 0.0
    %331 = vmatpush1.msra.mxu0 0.0
    %332 = vmatprep.subr.mxu0 0.0
    %333 = vmatpush1.msra.mxu0 0.0
    %334 = vmatprep.subr.mxu0 0.0
    %335 = vmatpush1.msra.mxu0 0.0
    %336 = vmatprep.subr.mxu0 0.0
    %337 = vmatpush1.msra.mxu0 0.0
    %338 = vmatprep.subr.mxu0 0.0
    %339 = vmatpush1.msra.mxu0 0.0
    %340 = vmatprep.subr.mxu0 0.0
    %341 = vmatpush1.msra.mxu0 0.0
    %342 = vmatprep.subr.mxu0 0.0
    %343 = vmatpush1.msra.mxu0 0.0
    %344 = vmatprep.subr.mxu0 0.0
    %345 = vmatpush1.msra.mxu0 0.0
    %346 = vmatprep.subr.mxu0 0.0
    %347 = vmatpush1.msra.mxu0 0.0
    %348 = vmatprep.subr.mxu0 0.0
    %349 = vmatpush1.msra.mxu0 0.0
    %350 = vmatprep.subr.mxu0 0.0
    %351 = vmatpush1.msra.mxu0 0.0
    %352 = vmatprep.subr.mxu0 0.0
    %353 = vmatpush1.msra.mxu0 0.0
    %354 = vmatprep.subr.mxu0 0.0
    %355 = vmatpush1.msra.mxu0 0.0
    %356 = vmatprep.subr.mxu0 0.0
    %357 = vmatpush1.msra.mxu0 0.0
    %358 = vmatprep.subr.mxu0 0.0
    %359 = vmatpush1.msra.mxu0 0.0
    %360 = vmatprep.subr.mxu0 0.0
    %361 = vmatpush1.msra.mxu0 0.0
    %362 = vmatprep.mubr.f32.mxu0 0.0
    %363 = vmatmul.mubr.f32.gmra.mrb[0].mxu0 %v274
    %v364 = vpop.f32.mrb[0].mxu0
    %v365 = vadd.f32 %v296, %v364
    %v366 = vpop.f32.mrb[0].mxu0
    %367 = vdwg.mxu0
    %vm368 = vcmp.gt.f32.partialorder %v365, 0.0
    %v369 = vmul.f32 %v365, 0.01
    %v370 = vsel %vm368, %v365, %v369
    %v371 = vld [vmem:[#allocation11] sm:$0xff]
    %v372 = vld [vmem:[#allocation11 + $0x8] sm:$0xff]
    %v373 = vld [vmem:[#allocation11 + $0x10] sm:$0xff]
    %v374 = vld [vmem:[#allocation11 + $0x18] sm:$0xff]
    %v375 = vld [vmem:[#allocation11 + $0x20] sm:$0xff]
    %v376 = vld [vmem:[#allocation11 + $0x28] sm:$0xff]
    %v377 = vld [vmem:[#allocation11 + $0x30] sm:$0xff]
    %v378 = vld [vmem:[#allocation11 + $0x38] sm:$0xff]
    %v379 = vld [vmem:[#allocation11 + $0x40] sm:$0xff]
    %v380 = vld [vmem:[#allocation11 + $0x48] sm:$0xff]
    %v381 = vld [vmem:[#allocation11 + $0x50] sm:$0xff]
    %v382 = vld [vmem:[#allocation11 + $0x58] sm:$0xff]
    %v383 = vld [vmem:[#allocation11 + $0x60] sm:$0xff]
    %v384 = vld [vmem:[#allocation11 + $0x68] sm:$0xff]
    %v385 = vld [vmem:[#allocation11 + $0x70] sm:$0xff]
    %v386 = vld [vmem:[#allocation11 + $0x78] sm:$0xff]
    %v387 = vld [vmem:[%s8] sm:$0x1]
    %v389 = vlaneseq
    %v390 = vshrl.u32 %v389, 7
    %v391 = vsub.s32 0, %v390
    %v392 = vrot.slane %v387, %v391
    %394 = vmatprep.subr.mxu0 0.0
    %395 = vmatpush1.msra.mxu0 %v371
    %396 = vmatprep.subr.mxu0 0.0
    %397 = vmatpush1.msra.mxu0 %v372
    %398 = vmatprep.subr.mxu0 0.0
    %399 = vmatpush1.msra.mxu0 %v373
    %400 = vmatprep.subr.mxu0 0.0
    %401 = vmatpush1.msra.mxu0 %v374
    %402 = vmatprep.subr.mxu0 0.0
    %403 = vmatpush1.msra.mxu0 %v375
    %404 = vmatprep.subr.mxu0 0.0
    %405 = vmatpush1.msra.mxu0 %v376
    %406 = vmatprep.subr.mxu0 0.0
    %407 = vmatpush1.msra.mxu0 %v377
    %408 = vmatprep.subr.mxu0 0.0
    %409 = vmatpush1.msra.mxu0 %v378
    %410 = vmatprep.subr.mxu0 0.0
    %411 = vmatpush1.msra.mxu0 %v379
    %412 = vmatprep.subr.mxu0 0.0
    %413 = vmatpush1.msra.mxu0 %v380
    %414 = vmatprep.subr.mxu0 0.0
    %415 = vmatpush1.msra.mxu0 %v381
    %416 = vmatprep.subr.mxu0 0.0
    %417 = vmatpush1.msra.mxu0 %v382
    %418 = vmatprep.subr.mxu0 0.0
    %419 = vmatpush1.msra.mxu0 %v383
    %420 = vmatprep.subr.mxu0 0.0
    %421 = vmatpush1.msra.mxu0 %v384
    %422 = vmatprep.subr.mxu0 0.0
    %423 = vmatpush1.msra.mxu0 %v385
    %424 = vmatprep.subr.mxu0 0.0
    %425 = vmatpush1.msra.mxu0 %v386
    %426 = vmatprep.subr.mxu0 0.0
    %427 = vmatpush1.msra.mxu0 0.0
    %428 = vmatprep.subr.mxu0 0.0
    %429 = vmatpush1.msra.mxu0 0.0
    %430 = vmatprep.subr.mxu0 0.0
    %431 = vmatpush1.msra.mxu0 0.0
    %432 = vmatprep.subr.mxu0 0.0
    %433 = vmatpush1.msra.mxu0 0.0
    %434 = vmatprep.subr.mxu0 0.0
    %435 = vmatpush1.msra.mxu0 0.0
    %436 = vmatprep.subr.mxu0 0.0
    %437 = vmatpush1.msra.mxu0 0.0
    %438 = vmatprep.subr.mxu0 0.0
    %439 = vmatpush1.msra.mxu0 0.0
    %440 = vmatprep.subr.mxu0 0.0
    %441 = vmatpush1.msra.mxu0 0.0
    %442 = vmatprep.subr.mxu0 0.0
    %443 = vmatpush1.msra.mxu0 0.0
    %444 = vmatprep.subr.mxu0 0.0
    %445 = vmatpush1.msra.mxu0 0.0
    %446 = vmatprep.subr.mxu0 0.0
    %447 = vmatpush1.msra.mxu0 0.0
    %448 = vmatprep.subr.mxu0 0.0
    %449 = vmatpush1.msra.mxu0 0.0
    %450 = vmatprep.subr.mxu0 0.0
    %451 = vmatpush1.msra.mxu0 0.0
    %452 = vmatprep.subr.mxu0 0.0
    %453 = vmatpush1.msra.mxu0 0.0
    %454 = vmatprep.subr.mxu0 0.0
    %455 = vmatpush1.msra.mxu0 0.0
    %456 = vmatprep.subr.mxu0 0.0
    %457 = vmatpush1.msra.mxu0 0.0
    %458 = vmatprep.mubr.f32.mxu0 0.0
    %459 = vmatmul.mubr.f32.gmra.mrb[0].mxu0 %v370
    %v460 = vpop.f32.mrb[0].mxu0
    %v461 = vadd.f32 %v392, %v460
    %v462 = vpop.f32.mrb[0].mxu0
    %463 = vdwg.mxu0
    %v464 = vmax.f32 %v461, 0.0
    %465 = vst [vmem:[#allocation13] sm:$0xff] %v464
    // Predicated region
    $region62: #{tpu_custom_call.1} parent=1 // pred_check
      _
    $region63: #{tpu_custom_call.1} parent=1 // pred_check_branch
      %467 = sbr.rel (0) target = $region65
    $region64: #{tpu_custom_call.1} parent=1 // pred_region
      %s469 = ssub.s32 128, 128
      %470 = vsyncadd [#allocation4], %s469
      %s472 = sshll.u32 [#allocation13], 4
      %s473 = int_to_ptr.vmem [resolvable:$true] %s472
      %475 = dma.vmem_to_hbm [thread:$0]  %s473, 128, %s9, [#allocation4]
    $region65: #{tpu_custom_call.1} parent=1 // pred_fallthru
      _
    // Predicated region
    $region66: #{tpu_custom_call.1} parent=1 // pred_check
      _
    $region67: #{tpu_custom_call.1} parent=1 // pred_check_branch
      %477 = sbr.rel (0) target = $region69
    $region68: #{tpu_custom_call.1} parent=1 // pred_region
      %478 = dma.done [#allocation4], 128
    $region69: #{tpu_custom_call.1} parent=1 // pred_fallthru
      _
    %479 = vsyncpa [#allocation3], 1
    %480 = vsyncpa [#allocation6], 1
    %481 = vsyncpa [#allocation9], 1
    %482 = vsyncpa [#allocation12], 1
    %483 = vsyncpa [#allocation4], 1

</llo_original>
